<compile_context>
chip_gen: v7x
topology: tpu7x:2x2x1
jax: 0.10.0
libtpu: 0.0.40
codegen_flags: <defaults>
</compile_context>

<pallas_src>
import functools

import jax
import jax.numpy as jnp
from jax import lax
from jax.experimental import pallas as pl
from jax.experimental.pallas import tpu as pltpu


# ----------------------------------------------------------------------------
# small helpers
# ----------------------------------------------------------------------------
def _row_tile(m, candidates=(1024, 512, 256, 128, 64, 32, 16, 8)):
    """Largest convenient row tile that divides m (falls back to the full dim)."""
    for t in candidates:
        if m >= t and m % t == 0:
            return t
    return m


def _pad_rows(x2d, rows):
    if x2d.shape[0] == rows:
        return x2d
    return jnp.pad(x2d, ((0, rows - x2d.shape[0]), (0, 0)))


def _pad_vec(v, n):
    if v.shape[0] == n:
        return v
    return jnp.pad(v, ((0, n - v.shape[0]),))


# ----------------------------------------------------------------------------
# Kernel 1: fused Q/K/V projection  y[p] = x[p] @ W[p]^T + b[p]
#   single pallas_call, grid = (3, M // tm); weights kept un-transposed and
#   consumed via dot_general contracting the last dims (MXU-direct, no XLU).
# ----------------------------------------------------------------------------
def _qkv_projection_kernel(x_ref, w_ref, b_ref, o_ref, *, compute_dtype):
    x = x_ref[...].astype(compute_dtype)          # (tm, d_model)
    w = w_ref[...].astype(compute_dtype)          # (D, d_model)
    y = lax.dot_general(x, w, (((1,), (1,)), ((), ())),
                        preferred_element_type=jnp.float32)
    o_ref[...] = y + b_ref[...]                   # bias (1, D) broadcasts


def pallas_qkv_projection(x_stk, w_stk, b_stk, *, compute_dtype=jnp.float32):
    n_proj, m, d_in = x_stk.shape
    d_out = w_stk.shape[1]
    tm = _row_tile(m)
    kernel = functools.partial(_qkv_projection_kernel, compute_dtype=compute_dtype)
    return pl.pallas_call(
        kernel,
        out_shape=jax.ShapeDtypeStruct((n_proj, m, d_out), jnp.float32),
        grid=(n_proj, m // tm),
        in_specs=[
            pl.BlockSpec((None, tm, d_in), lambda p, i: (p, i, 0)),
            pl.BlockSpec((None, d_out, d_in), lambda p, i: (p, 0, 0)),
            pl.BlockSpec((None, 1, d_out), lambda p, i: (p, 0, 0)),
        ],
        out_specs=pl.BlockSpec((None, tm, d_out), lambda p, i: (p, i, 0)),
        compiler_params=pltpu.CompilerParams(
            dimension_semantics=("parallel", "parallel")),
    )(x_stk, w_stk, b_stk)


# ----------------------------------------------------------------------------
# Kernel 2: scaled-dot-product attention, ALL heads of one batch per grid step.
#   Heads live in the lane dimension of the q/k/v/out blocks (projection layout);
#   per-head compute uses static lane slices.  Mask is read once per batch.
# ----------------------------------------------------------------------------
def _attention_kernel(q_ref, k_ref, v_ref, m_ref, o_ref, a_ref, *,
                      n_head, d_k, d_v, inv_temperature, compute_dtype):
    q = q_ref[...] * inv_temperature     # (Lq, n_head*d_k)  scale folded into q
    k = k_ref[...]                       # (Lk, n_head*d_k)
    v = v_ref[...]                       # (Lk, n_head*d_v)
    masked = m_ref[...] != 0             # (Lq, Lk)  True == mask out

    for h in range(n_head):              # static unroll: all heads in one grid step
        q_h = q[:, h * d_k:(h + 1) * d_k].astype(compute_dtype)
        k_h = k[:, h * d_k:(h + 1) * d_k].astype(compute_dtype)
        s = lax.dot_general(q_h, k_h, (((1,), (1,)), ((), ())),
                            preferred_element_type=jnp.float32)        # (Lq, Lk)
        # masked_fill(-inf): fully-masked rows go NaN exactly like the torch module.
        s = jnp.where(masked, -jnp.inf, s)
        s_max = jnp.max(s, axis=-1, keepdims=True)
        e = jnp.exp(s - s_max)
        denom = jnp.sum(e, axis=-1, keepdims=True)
        p = e * pl.reciprocal(denom, approx=True)                      # EUP reciprocal
        a_ref[h] = p
        v_h = v[:, h * d_v:(h + 1) * d_v].astype(compute_dtype)
        o_ref[:, h * d_v:(h + 1) * d_v] = lax.dot_general(
            p.astype(compute_dtype), v_h, (((1,), (0,)), ((), ())),
            preferred_element_type=jnp.float32)


def pallas_attention(qp, kp, vp, mask_i, *, n_head, d_k, d_v, temperature,
                     compute_dtype=jnp.float32):
    sz_b, len_q, _ = qp.shape
    len_k = kp.shape[1]
    kernel = functools.partial(
        _attention_kernel, n_head=n_head, d_k=d_k, d_v=d_v,
        inv_temperature=1.0 / temperature, compute_dtype=compute_dtype)
    out, attn = pl.pallas_call(
        kernel,
        out_shape=(
            jax.ShapeDtypeStruct((sz_b, len_q, n_head * d_v), jnp.float32),
            jax.ShapeDtypeStruct((n_head, sz_b, len_q, len_k), jnp.float32),
        ),
        grid=(sz_b,),
        in_specs=[
            pl.BlockSpec((None, len_q, n_head * d_k), lambda b: (b, 0, 0)),
            pl.BlockSpec((None, len_k, n_head * d_k), lambda b: (b, 0, 0)),
            pl.BlockSpec((None, len_k, n_head * d_v), lambda b: (b, 0, 0)),
            pl.BlockSpec((None, len_q, len_k), lambda b: (b, 0, 0)),
        ],
        out_specs=(
            pl.BlockSpec((None, len_q, n_head * d_v), lambda b: (b, 0, 0)),
            pl.BlockSpec((n_head, None, len_q, len_k), lambda b: (0, b, 0, 0)),
        ),
        compiler_params=pltpu.CompilerParams(dimension_semantics=("parallel",)),
    )(qp, kp, vp, mask_i)
    return out, attn


# ----------------------------------------------------------------------------
# Kernel 3: fused output projection + residual add + LayerNorm, tiled over rows.
#   y = LayerNorm( (x @ Wfc^T + bfc) + residual )
# ----------------------------------------------------------------------------
def _fc_residual_ln_kernel(x_ref, w_ref, b_ref, r_ref, g_ref, beta_ref, o_ref, *,
                           eps, compute_dtype):
    x = x_ref[...].astype(compute_dtype)          # (tm, n_head*d_v)
    w = w_ref[...].astype(compute_dtype)          # (d_model, n_head*d_v)
    y = lax.dot_general(x, w, (((1,), (1,)), ((), ())),
                        preferred_element_type=jnp.float32)
    y = y + b_ref[...] + r_ref[...]
    mean = jnp.mean(y, axis=-1, keepdims=True)
    var = jnp.mean(jnp.square(y - mean), axis=-1, keepdims=True)
    o_ref[...] = (y - mean) * lax.rsqrt(var + eps) * g_ref[...] + beta_ref[...]


def pallas_fc_residual_ln(x2d, w, b, res2d, gamma, beta, *, eps=1e-5,
                          compute_dtype=jnp.float32):
    m, d_in = x2d.shape
    d_out = w.shape[0]
    tm = _row_tile(m)
    kernel = functools.partial(_fc_residual_ln_kernel, eps=eps,
                               compute_dtype=compute_dtype)
    return pl.pallas_call(
        kernel,
        out_shape=jax.ShapeDtypeStruct((m, d_out), jnp.float32),
        grid=(m // tm,),
        in_specs=[
            pl.BlockSpec((tm, d_in), lambda i: (i, 0)),
            pl.BlockSpec((d_out, d_in), lambda i: (0, 0)),
            pl.BlockSpec((1, d_out), lambda i: (0, 0)),
            pl.BlockSpec((tm, d_out), lambda i: (i, 0)),
            pl.BlockSpec((1, d_out), lambda i: (0, 0)),
            pl.BlockSpec((1, d_out), lambda i: (0, 0)),
        ],
        out_specs=pl.BlockSpec((tm, d_out), lambda i: (i, 0)),
        compiler_params=pltpu.CompilerParams(dimension_semantics=("parallel",)),
    )(x2d, w, b.reshape(1, d_out), res2d, gamma.reshape(1, d_out),
      beta.reshape(1, d_out))


# ----------------------------------------------------------------------------
# Full MultiHeadAttention forward (eval mode — dropout is identity)
# ----------------------------------------------------------------------------
def multi_head_attention(params, q, k, v, mask, *, compute_dtype=jnp.float32):
    n_head, d_k, d_v = params["n_head"], params["d_k"], params["d_v"]
    sz_b, len_q, d_model = q.shape
    len_k = k.shape[1]
    residual = q

    d_qk_out = n_head * d_k
    d_v_out = n_head * d_v
    d_max = max(d_qk_out, d_v_out)
    m_q = sz_b * len_q
    m_k = sz_b * len_k
    m_max = max(m_q, m_k)

    # --- fused Q/K/V projections: one pallas_call on a shared grid ---
    x_stk = jnp.stack([
        _pad_rows(q.reshape(m_q, d_model), m_max),
        _pad_rows(k.reshape(m_k, d_model), m_max),
        _pad_rows(v.reshape(m_k, d_model), m_max),
    ])                                                       # (3, m_max, d_model)
    w_stk = jnp.stack([
        _pad_rows(params["w_qs"], d_max),
        _pad_rows(params["w_ks"], d_max),
        _pad_rows(params["w_vs"], d_max),
    ])                                                       # (3, d_max, d_model)
    b_stk = jnp.stack([
        _pad_vec(params["b_qs"], d_max),
        _pad_vec(params["b_ks"], d_max),
        _pad_vec(params["b_vs"], d_max),
    ]).reshape(3, 1, d_max)

    proj = pallas_qkv_projection(x_stk, w_stk, b_stk, compute_dtype=compute_dtype)

    # free (contiguous) reshapes back to (sz_b, L, n_head*d) — no head transposes.
    qp = proj[0, :m_q, :d_qk_out].reshape(sz_b, len_q, d_qk_out)
    kp = proj[1, :m_k, :d_qk_out].reshape(sz_b, len_k, d_qk_out)
    vp = proj[2, :m_k, :d_v_out].reshape(sz_b, len_k, d_v_out)

    # mask is indexed per batch by the attention BlockSpec (no n_head tiling).
    mask_i = mask.astype(jnp.int32)                          # (sz_b, len_q, len_k)

    out_bqh, attn_hb = pallas_attention(
        qp, kp, vp, mask_i, n_head=n_head, d_k=d_k, d_v=d_v,
        temperature=float(d_k) ** 0.5, compute_dtype=compute_dtype)
    # out_bqh: (sz_b, len_q, n_head*d_v)  — already in fc-ready layout
    # attn_hb: (n_head, sz_b, len_q, len_k) — torch layout after a free reshape

    out2d = pallas_fc_residual_ln(
        out_bqh.reshape(m_q, d_v_out),
        params["w_fc"], params["b_fc"],
        residual.reshape(m_q, d_model),
        params["ln_gamma"], params["ln_beta"],
        compute_dtype=compute_dtype)

    out = out2d.reshape(sz_b, len_q, d_model)
    attn = attn_hb.reshape(n_head * sz_b, len_q, len_k)
    return out, attn


# ----------------------------------------------------------------------------
# Pure-JAX reference (mirrors the PyTorch forward exactly)
# ----------------------------------------------------------------------------
def reference_mha(params, q, k, v, mask):
    n_head, d_k, d_v = params["n_head"], params["d_k"], params["d_v"]
    sz_b, len_q, d_model = q.shape
    len_k = k.shape[1]
    residual = q
    qp = q @ params["w_qs"].T + params["b_qs"]
    kp = k @ params["w_ks"].T + params["b_ks"]
    vp = v @ params["w_vs"].T + params["b_vs"]
    qh = qp.reshape(sz_b, len_q, n_head, d_k).transpose(2, 0, 1, 3).reshape(-1, len_q, d_k)
    kh = kp.reshape(sz_b, len_k, n_head, d_k).transpose(2, 0, 1, 3).reshape(-1, len_k, d_k)
    vh = vp.reshape(sz_b, len_k, n_head, d_v).transpose(2, 0, 1, 3).reshape(-1, len_k, d_v)
    mask_h = jnp.tile(mask, (n_head, 1, 1))
    scores = jnp.einsum("bqd,bkd->bqk", qh, kh)
    scores = jnp.where(mask_h, -jnp.inf, scores) / (float(d_k) ** 0.5)
    attn = jax.nn.softmax(scores, axis=-1)
    out_h = jnp.einsum("bqk,bkd->bqd", attn, vh)
    out = (out_h.reshape(n_head, sz_b, len_q, d_v)
           .transpose(1, 2, 0, 3).reshape(sz_b, len_q, n_head * d_v))
    y = out @ params["w_fc"].T + params["b_fc"] + residual
    mean = jnp.mean(y, axis=-1, keepdims=True)
    var = jnp.mean(jnp.square(y - mean), axis=-1, keepdims=True)
    y = (y - mean) / jnp.sqrt(var + 1e-5) * params["ln_gamma"] + params["ln_beta"]
    return y, attn


def init_params(key, n_head, d_model, d_k, d_v):
    ks = jax.random.split(key, 8)
    std_qk = (2.0 / (d_model + d_k)) ** 0.5
    std_v = (2.0 / (d_model + d_v)) ** 0.5
    xavier_fc = (2.0 / (n_head * d_v + d_model)) ** 0.5
    return {
        "n_head": n_head, "d_k": d_k, "d_v": d_v,
        "w_qs": std_qk * jax.random.normal(ks[0], (n_head * d_k, d_model), jnp.float32),
        "b_qs": 0.01 * jax.random.normal(ks[1], (n_head * d_k,), jnp.float32),
        "w_ks": std_qk * jax.random.normal(ks[2], (n_head * d_k, d_model), jnp.float32),
        "b_ks": 0.01 * jax.random.normal(ks[3], (n_head * d_k,), jnp.float32),
        "w_vs": std_v * jax.random.normal(ks[4], (n_head * d_v, d_model), jnp.float32),
        "b_vs": 0.01 * jax.random.normal(ks[5], (n_head * d_v,), jnp.float32),
        "w_fc": xavier_fc * jax.random.normal(ks[6], (d_model, n_head * d_v), jnp.float32),
        "b_fc": 0.01 * jax.random.normal(ks[7], (d_model,), jnp.float32),
        "ln_gamma": jnp.ones((d_model,), jnp.float32),
        "ln_beta": jnp.zeros((d_model,), jnp.float32),
    }


if __name__ == "__main__":
    n_head, d_model, d_k, d_v = 4, 32, 8, 8
    sz_b, seq = 2, 8

    key = jax.random.PRNGKey(0)
    kq, kk, kv, kp = jax.random.split(key, 4)
    q = jax.random.normal(kq, (sz_b, seq, d_model), jnp.float32)
    k = jax.random.normal(kk, (sz_b, seq, d_model), jnp.float32)
    v = jax.random.normal(kv, (sz_b, seq, d_model), jnp.float32)

    # padding-style mask: True == masked out (batch 1 has last 2 keys padded)
    lens = jnp.array([seq, seq - 2])
    key_pos = jnp.arange(seq)
    mask = key_pos[None, None, :] >= lens[:, None, None]
    mask = jnp.broadcast_to(mask, (sz_b, seq, seq))

    params = init_params(kp, n_head, d_model, d_k, d_v)

    # f32 path (reference semantics)
    out, attn = multi_head_attention(params, q, k, v, mask)
    out = jax.block_until_ready(out)
    attn = jax.block_until_ready(attn)

    ref_out, ref_attn = reference_mha(params, q, k, v, mask)
    assert out.shape == (sz_b, seq, d_model)
    assert attn.shape == (n_head * sz_b, seq, seq)
    # slightly looser tolerance than exact f32 because of the approx EUP reciprocal
    assert jnp.allclose(out, ref_out, atol=5e-3, rtol=5e-3)
    assert jnp.allclose(attn, ref_attn, atol=5e-3, rtol=5e-3)

    # bf16 MXU-operand fast path (v6e/v7x): f32 accumulation + f32 softmax stats
    out_bf, attn_bf = multi_head_attention(params, q, k, v, mask,
                                           compute_dtype=jnp.bfloat16)
    out_bf = jax.block_until_ready(out_bf)
    attn_bf = jax.block_until_ready(attn_bf)
    assert jnp.all(jnp.isfinite(out_bf))
    assert jnp.allclose(out_bf, ref_out, atol=1e-1, rtol=1e-1)
    assert jnp.allclose(attn_bf, ref_attn, atol=1e-1, rtol=1e-1)

    print("KERNEL_OK")
</pallas_src>

<mosaic_0001>
module attributes {stable_mosaic.version = 11 : i64} {
  func.func @_qkv_projection_kernel(%arg0: i32, %arg1: i32, %arg2: memref<1x16x32xf32, #tpu.memory_space<vmem>>, %arg3: memref<1x32x32xf32, #tpu.memory_space<vmem>>, %arg4: memref<1x1x32xf32, #tpu.memory_space<vmem>>, %arg5: memref<1x16x32xf32, #tpu.memory_space<vmem>>) attributes {dimension_semantics = [#tpu.dimension_semantics<parallel>, #tpu.dimension_semantics<parallel>], iteration_bounds = array<i64: 3, 1>, scalar_prefetch = 0 : i64, scratch_operands = 0 : i64, tpu.core_type = #tpu.core_type<tc>, window_params = [{transform_indices = @transform_0, window_bounds = array<i64: 1, 16, 32>}, {transform_indices = @transform_1, window_bounds = array<i64: 1, 32, 32>}, {transform_indices = @transform_2, window_bounds = array<i64: 1, 1, 32>}, {transform_indices = @transform_3, window_bounds = array<i64: 1, 16, 32>}]} {
    %c0 = arith.constant 0 : index
    %c0_0 = arith.constant 0 : index
    %c0_1 = arith.constant 0 : index
    %0 = vector.load %arg2[%c0, %c0_0, %c0_1] : memref<1x16x32xf32, #tpu.memory_space<vmem>>, vector<1x16x32xf32>
    %1 = vector.shape_cast %0 : vector<1x16x32xf32> to vector<16x32xf32>
    %c0_2 = arith.constant 0 : index
    %c0_3 = arith.constant 0 : index
    %c0_4 = arith.constant 0 : index
    %2 = vector.load %arg3[%c0_2, %c0_3, %c0_4] : memref<1x32x32xf32, #tpu.memory_space<vmem>>, vector<1x32x32xf32>
    %3 = vector.shape_cast %2 : vector<1x32x32xf32> to vector<32x32xf32>
    %cst = arith.constant dense<0.000000e+00> : vector<16x32xf32>
    %4 = tpu.matmul %1, %3, %cst {dimension_numbers = #tpu.dot_dimension_numbers<[1], [1], [0], [0], [0, 0, 1, 0], [], []>} : vector<16x32xf32>, vector<32x32xf32>, vector<16x32xf32> -> vector<16x32xf32>
    %c0_5 = arith.constant 0 : index
    %c0_6 = arith.constant 0 : index
    %c0_7 = arith.constant 0 : index
    %5 = vector.load %arg4[%c0_5, %c0_6, %c0_7] : memref<1x1x32xf32, #tpu.memory_space<vmem>>, vector<1x1x32xf32>
    %6 = vector.shape_cast %5 : vector<1x1x32xf32> to vector<1x32xf32>
    %7 = vector.broadcast %6 : vector<1x32xf32> to vector<16x32xf32>
    %8 = arith.addf %4, %7 : vector<16x32xf32>
    %c0_8 = arith.constant 0 : index
    %c0_9 = arith.constant 0 : index
    %c0_10 = arith.constant 0 : index
    %9 = vector.load %arg5[%c0_8, %c0_9, %c0_10] : memref<1x16x32xf32, #tpu.memory_space<vmem>>, vector<1x16x32xf32>
    %10 = vector.shape_cast %9 : vector<1x16x32xf32> to vector<16x32xf32>
    %11 = vector.shape_cast %8 : vector<16x32xf32> to vector<1x16x32xf32>
    tpu.vector_store %arg5[%c0_8, %c0_9, %c0_10], %11 {strides = array<i32>} : memref<1x16x32xf32, #tpu.memory_space<vmem>>, vector<1x16x32xf32>,
    return
  }
  func.func @transform_0(%arg0: i32, %arg1: i32) -> (i32, i32, i32) {
    %c0_i32 = arith.constant 0 : i32
    %c0_i32_0 = arith.constant 0 : i32
    return %arg0, %arg1, %c0_i32 : i32, i32, i32
  }
  func.func @transform_1(%arg0: i32, %arg1: i32) -> (i32, i32, i32) {
    %c0_i32 = arith.constant 0 : i32
    %c0_i32_0 = arith.constant 0 : i32
    %c0_i32_1 = arith.constant 0 : i32
    return %arg0, %c0_i32, %c0_i32_0 : i32, i32, i32
  }
  func.func @transform_2(%arg0: i32, %arg1: i32) -> (i32, i32, i32) {
    %c0_i32 = arith.constant 0 : i32
    %c0_i32_0 = arith.constant 0 : i32
    %c0_i32_1 = arith.constant 0 : i32
    return %arg0, %c0_i32, %c0_i32_0 : i32, i32, i32
  }
  func.func @transform_3(%arg0: i32, %arg1: i32) -> (i32, i32, i32) {
    %c0_i32 = arith.constant 0 : i32
    %c0_i32_0 = arith.constant 0 : i32
    return %arg0, %arg1, %c0_i32 : i32, i32, i32
  }
}

</mosaic_0001>

<llo_original>
// kernel: tpu_custom_call.1
$region0: #{tpu_custom_call.1}
  #allocation0 [shape = 'u32[]', space=smem, size = 0x4, offset = 0x4, fixed_abs, tag = 'smem constant byte address 0x4 - core index']
  #allocation1 [shape = 'u32[144,128]{1,0:T(1,128)}', space=vmem, size = 0x12000, scoped, tag = 'internal scratch']
  %s0 = inlined_call_operand.hbm [shape: f32[3,16,32], index: 0, kind: input, shape index: {}]
  %s1 = inlined_call_operand.hbm [shape: f32[3,32,32], index: 1, kind: input, shape index: {}]
  %s2 = inlined_call_operand.vmem [shape: f32[3,1,32], index: 2, kind: input, shape index: {}]
  %s3 = inlined_call_operand.hbm [shape: f32[3,16,32], index: 3, kind: output, shape index: {}]
  %s4 = sld [smem:[#allocation0]]
  $region53: #{tpu_custom_call.1} parent=0
    _
  %s6 = ssub.s32 1, %s4
  %s7 = scalar_select 0, %s6, %s4
  $region1: #{tpu_custom_call.1} parent=0
    #allocation2 [shape = 'u8[16384]{0}', space=vmem, size = 0x4000, scoped, tag = 'input window, operand 0']
    #allocation3 [shape = 's32[2]{0}', space=sflag, size = 0x8, scoped, tag = 'scoped memory for tpu_custom_call.1']
    #allocation4 [shape = 's32[2]{0}', space=sflag, size = 0x8, scoped, tag = 'scoped memory for tpu_custom_call.1']
    #allocation5 [shape = 'u8[32768]{0}', space=vmem, size = 0x8000, scoped, tag = 'input window, operand 1']
    #allocation6 [shape = 's32[2]{0}', space=sflag, size = 0x8, scoped, tag = 'scoped memory for tpu_custom_call.1']
    #allocation7 [shape = 'u8[16384]{0}', space=vmem, size = 0x4000, scoped, tag = 'output window, operand 0']
    %8 = vsyncpa [#allocation3], 0
    %s9 = scalar_lea.sflag [#allocation3], 1
    %10 = vsyncpa %s9, 0
    %11 = vsyncpa [#allocation6], 0
    %s12 = scalar_lea.sflag [#allocation6], 1
    %13 = vsyncpa %s12, 0
    %14 = vsyncpa [#allocation4], 0
    %s15 = scalar_lea.sflag [#allocation4], 1
    %16 = vsyncpa %s15, 0
    loop: start=0, step=1, limit=5
    $region2: #{tpu_custom_call.1} parent=1 // loop_pre_header
      _
    $region3: #{tpu_custom_call.1} parent=1 // loop_header
      %s18 = sphi 0, %s22
      %p19 = scmp.ge.s32.totalorder %s18, 5
      %s25 = sphi 0, %s37
      %s26 = sphi 0, %s33
      %s27 = sphi 0, %s25
      %s28 = sphi 0, %s26
      %s29 = sphi 0, %s27
      %s30 = sphi 0, %s28
      %s42 = sphi 0, %s44
      %s45 = sphi 0, %s42
      %s46 = sphi 0, %s45
      %s62 = sphi 0, %s46
      %s68 = sphi 0, %s70
      %s71 = sphi 0, %s68
      %s72 = sphi 0, %s71
      %s88 = sphi 0, %s72
      %s94 = sphi 0, %s96
      %s97 = sphi 0, %s94
      %s98 = sphi 0, %s97
      %s114 = sphi 0, %s98
      %s122 = sphi 0, %s124
      %s125 = sphi 0, %s122
      %s126 = sphi 0, %s125
      %s142 = sphi 0, %s126
    $region4: #{tpu_custom_call.1} parent=1 // loop_header_branch
      %21 = sbr.rel (%p19) target = $region8
    $region5: #{tpu_custom_call.1} parent=1 // loop_body
      %s23 = ssub.s32 %s18, 1
      %s24 = ssub.s32 %s18, 2
      %s31 = sadd.s32 1, %s26
      %p32 = scmp.ge.s32.totalorder %s31, 1
      %s33 = scalar_select %p32, 0, %s31
      %s34 = sadd.s32 1, %s25
      %s35 = scalar_select %p32, %s34, %s25
      %p36 = scmp.ge.s32.totalorder %s35, 3
      %s37 = scalar_select %p36, 0, %s35
      %s38 = ssub.s32 %s25, %s37
      %s39 = ssub.s32 %s26, %s33
      %s40 = sor.u32 %s38, %s39
      %p41 = scmp.eq.s32.totalorder %s40, 0
      %s43 = sadd.s32 %s42, 1
      %s44 = scalar_select %p41, %s42, %s43
      %p47 = pneg %p41
      %p48 = scmp.eq.s32.totalorder %s18, 2
      %p49 = por %p47, %p48
      %p50 = scmp.ne.s32.totalorder %s42, %s45
      %p51 = scmp.eq.s32.totalorder %s18, 0
      %p52 = por %p50, %p51
      %p53 = scmp.ne.s32.totalorder %s42, %s45
      %p54 = scmp.eq.s32.totalorder %s23, 2
      %p55 = por %p53, %p54
      %p56 = scmp.ne.s32.totalorder %s45, %s46
      %p57 = scmp.eq.s32.totalorder %s23, 0
      %p58 = por %p56, %p57
      %p59 = scmp.ne.s32.totalorder %s45, %s46
      %p60 = scmp.eq.s32.totalorder %s24, 2
      %p61 = por %p59, %p60
      %p63 = scmp.ne.s32.totalorder %s46, %s62
      %p64 = scmp.eq.s32.totalorder %s24, 0
      %p65 = por %p63, %p64
      %s66 = ssub.s32 %s25, %s37
      %p67 = scmp.eq.s32.totalorder %s66, 0
      %s69 = sadd.s32 %s68, 1
      %s70 = scalar_select %p67, %s68, %s69
      %p73 = pneg %p67
      %p74 = scmp.eq.s32.totalorder %s18, 2
      %p75 = por %p73, %p74
      %p76 = scmp.ne.s32.totalorder %s68, %s71
      %p77 = scmp.eq.s32.totalorder %s18, 0
      %p78 = por %p76, %p77
      %p79 = scmp.ne.s32.totalorder %s68, %s71
      %p80 = scmp.eq.s32.totalorder %s23, 2
      %p81 = por %p79, %p80
      %p82 = scmp.ne.s32.totalorder %s71, %s72
      %p83 = scmp.eq.s32.totalorder %s23, 0
      %p84 = por %p82, %p83
      %p85 = scmp.ne.s32.totalorder %s71, %s72
      %p86 = scmp.eq.s32.totalorder %s24, 2
      %p87 = por %p85, %p86
      %p89 = scmp.ne.s32.totalorder %s72, %s88
      %p90 = scmp.eq.s32.totalorder %s24, 0
      %p91 = por %p89, %p90
      %s92 = ssub.s32 %s25, %s37
      %p93 = scmp.eq.s32.totalorder %s92, 0
      %s95 = sadd.s32 %s94, 1
      %s96 = scalar_select %p93, %s94, %s95
      %p99 = pneg %p93
      %p100 = scmp.eq.s32.totalorder %s18, 2
      %p101 = por %p99, %p100
      %p102 = scmp.ne.s32.totalorder %s94, %s97
      %p103 = scmp.eq.s32.totalorder %s18, 0
      %p104 = por %p102, %p103
      %p105 = scmp.ne.s32.totalorder %s94, %s97
      %p106 = scmp.eq.s32.totalorder %s23, 2
      %p107 = por %p105, %p106
      %p108 = scmp.ne.s32.totalorder %s97, %s98
      %p109 = scmp.eq.s32.totalorder %s23, 0
      %p110 = por %p108, %p109
      %p111 = scmp.ne.s32.totalorder %s97, %s98
      %p112 = scmp.eq.s32.totalorder %s24, 2
      %p113 = por %p111, %p112
      %p115 = scmp.ne.s32.totalorder %s98, %s114
      %p116 = scmp.eq.s32.totalorder %s24, 0
      %p117 = por %p115, %p116
      %s118 = ssub.s32 %s25, %s37
      %s119 = ssub.s32 %s26, %s33
      %s120 = sor.u32 %s118, %s119
      %p121 = scmp.eq.s32.totalorder %s120, 0
      %s123 = sadd.s32 %s122, 1
      %s124 = scalar_select %p121, %s122, %s123
      %p127 = pneg %p121
      %p128 = scmp.eq.s32.totalorder %s18, 2
      %p129 = por %p127, %p128
      %p130 = scmp.ne.s32.totalorder %s122, %s125
      %p131 = scmp.eq.s32.totalorder %s18, 0
      %p132 = por %p130, %p131
      %p133 = scmp.ne.s32.totalorder %s122, %s125
      %p134 = scmp.eq.s32.totalorder %s23, 2
      %p135 = por %p133, %p134
      %p136 = scmp.ne.s32.totalorder %s125, %s126
      %p137 = scmp.eq.s32.totalorder %s23, 0
      %p138 = por %p136, %p137
      %p139 = scmp.ne.s32.totalorder %s125, %s126
      %p140 = scmp.eq.s32.totalorder %s24, 2
      %p141 = por %p139, %p140
      %p143 = scmp.ne.s32.totalorder %s126, %s142
      %p144 = scmp.eq.s32.totalorder %s24, 0
      %p145 = por %p143, %p144
      %p146 = scmp.le.s32.totalorder 1, %s18
      %p147 = scmp.lt.s32.totalorder %s18, 4
      %p148 = pnand %p146, %p147
      %p149 = pneg %p148
      // Predicated region
      $region9: #{tpu_custom_call.1} parent=5 // pred_check
        _
      $region10: #{tpu_custom_call.1} parent=5 // pred_check_branch
        %151 = sbr.rel (%p148) target = $region12
      $region11: #{tpu_custom_call.1} parent=5 // pred_region
        %s152 = ssub.s32 %s18, 1
      $region12: #{tpu_custom_call.1} parent=5 // pred_fallthru
        _
      %p153 = scmp.lt.s32.totalorder %s18, 3
      // Predicated region
      $region13: #{tpu_custom_call.1} parent=5 // pred_check
        %p154 = pneg %p153
      $region14: #{tpu_custom_call.1} parent=5 // pred_check_branch
        %156 = sbr.rel (%p154) target = $region16
      $region15: #{tpu_custom_call.1} parent=5 // pred_region
        // Predicated region
        $region17: #{tpu_custom_call.1} parent=15 // pred_check
          %p157 = pneg %p52
        $region18: #{tpu_custom_call.1} parent=15 // pred_check_branch
          %159 = sbr.rel (%p157) target = $region20
        $region19: #{tpu_custom_call.1} parent=15 // pred_region
          %s160 = sand.u32 %s42, 1
          %s161 = scalar_lea.sflag [#allocation3], %s160
          %s162 = sand.u32 %s42, 1
          %s163 = smul.addr %s162, 16
          %s164 = scalar_lea.vmem [#allocation2], %s163
          %s165 = smul.u32 2, %s26
          %s167 = ssub.s32 256, 256
          %168 = vsyncadd %s161, %s167
          %s169 = smul.addr %s25, 2
          %s170 = sadd.s32 %s165, %s169
          %s171 = smul.addr %s170, 128
          %s172 = scalar_lea.hbm %s0, %s171
          %s173 = sshll.u32 %s164, 4
          %s174 = int_to_ptr.vmem [resolvable:$true] %s173
          %179 = dma.hbm_to_vmem [thread:$0]  %s172, 256, %s174, %s161, 128, 128, 8
        $region20: #{tpu_custom_call.1} parent=15 // pred_fallthru
          _
        // Predicated region
        $region21: #{tpu_custom_call.1} parent=15 // pred_check
          %p180 = pneg %p78
        $region22: #{tpu_custom_call.1} parent=15 // pred_check_branch
          %182 = sbr.rel (%p180) target = $region24
        $region23: #{tpu_custom_call.1} parent=15 // pred_region
          %s183 = sand.u32 %s68, 1
          %s184 = scalar_lea.sflag [#allocation6], %s183
          %s185 = sand.u32 %s68, 1
          %s186 = smul.addr %s185, 32
          %s187 = scalar_lea.vmem [#allocation5], %s186
          %s189 = ssub.s32 512, 512
          %190 = vsyncadd %s184, %s189
          %s191 = smul.addr %s25, 4
          %s192 = smul.addr %s191, 128
          %s193 = scalar_lea.hbm %s1, %s192
          %s194 = sshll.u32 %s187, 4
          %s195 = int_to_ptr.vmem [resolvable:$true] %s194
          %200 = dma.hbm_to_vmem [thread:$0]  %s193, 512, %s195, %s184, 128, 128, 8
        $region24: #{tpu_custom_call.1} parent=15 // pred_fallthru
          _
        // Predicated region
        $region25: #{tpu_custom_call.1} parent=15 // pred_check
          %p201 = pneg %p104
        $region26: #{tpu_custom_call.1} parent=15 // pred_check_branch
          %203 = sbr.rel (%p201) target = $region28
        $region27: #{tpu_custom_call.1} parent=15 // pred_region
          %p204 = scmp.lt.s32.totalorder %s25, 2
          %s205 = scalar_select %p204, %s25, 2
          %s206 = scalar_lea.vmem %s2, %s205
        $region28: #{tpu_custom_call.1} parent=15 // pred_fallthru
          _
      $region16: #{tpu_custom_call.1} parent=5 // pred_fallthru
        _
      %p207 = scmp.le.s32.totalorder 1, %s18
      %p208 = scmp.lt.s32.totalorder %s18, 4
      %p209 = pnand %p207, %p208
      %p210 = pneg %p209
      // Predicated region
      $region29: #{tpu_custom_call.1} parent=5 // pred_check
        _
      $region30: #{tpu_custom_call.1} parent=5 // pred_check_branch
        %212 = sbr.rel (%p209) target = $region32
      $region31: #{tpu_custom_call.1} parent=5 // pred_region
        %s213 = ssub.s32 %s18, 1
        %s214 = sand.u32 %s45, 1
        %s215 = scalar_lea.sflag [#allocation3], %s214
        %s216 = sand.u32 %s45, 1
        %s217 = smul.addr %s216, 16
        %s218 = scalar_lea.vmem [#allocation2], %s217
        // Predicated region
        $region33: #{tpu_custom_call.1} parent=31 // pred_check
          %p219 = pneg %p58
        $region34: #{tpu_custom_call.1} parent=31 // pred_check_branch
          %221 = sbr.rel (%p219) target = $region36
        $region35: #{tpu_custom_call.1} parent=31 // pred_region
          %222 = dma.done %s215, 256
        $region36: #{tpu_custom_call.1} parent=31 // pred_fallthru
          _
        %s223 = sand.u32 %s71, 1
        %s224 = scalar_lea.sflag [#allocation6], %s223
        %s225 = sand.u32 %s71, 1
        %s226 = smul.addr %s225, 32
        %s227 = scalar_lea.vmem [#allocation5], %s226
        // Predicated region
        $region37: #{tpu_custom_call.1} parent=31 // pred_check
          %p228 = pneg %p84
        $region38: #{tpu_custom_call.1} parent=31 // pred_check_branch
          %230 = sbr.rel (%p228) target = $region40
        $region39: #{tpu_custom_call.1} parent=31 // pred_region
          %231 = dma.done %s224, 512
        $region40: #{tpu_custom_call.1} parent=31 // pred_fallthru
          _
        %s232 = sand.u32 %s45, 1
        %s233 = scalar_lea.sflag [#allocation3], %s232
        %s234 = sand.u32 %s45, 1
        %s235 = smul.addr %s234, 16
        %s236 = scalar_lea.vmem [#allocation2], %s235
        %p237 = pneg %p58
        %p238 = pneg %p55
        %s239 = sand.u32 %s71, 1
        %s240 = scalar_lea.sflag [#allocation6], %s239
        %s241 = sand.u32 %s71, 1
        %s242 = smul.addr %s241, 32
        %s243 = scalar_lea.vmem [#allocation5], %s242
        %p244 = pneg %p84
        %p245 = pneg %p81
        %p246 = scmp.lt.s32.totalorder %s27, 2
        %s247 = scalar_select %p246, %s27, 2
        %s248 = scalar_lea.vmem %s2, %s247
        %p249 = pneg %p110
        %p250 = pneg %p107
        %p251 = pneg %p138
        %p252 = pneg %p135
        %s253 = sand.u32 %s125, 1
        %s254 = scalar_lea.sflag [#allocation4], %s253
        %s255 = sand.u32 %s125, 1
        %s256 = smul.addr %s255, 16
        %s257 = scalar_lea.vmem [#allocation7], %s256
        %s258 = smul.u32 2, %s28
        %p259 = scmp.lt.s32.totalorder %s27, 2
        %s260 = scalar_select %p259, %s27, 2
        %s261 = scalar_lea.vmem %s2, %s260
        %s262 = smul.u32 2, %s28
        %v263 = vld [vmem:[%s218] sm:$0xff]
        %v264 = vld [vmem:[%s218 + $0x8] sm:$0xff]
        %v265 = vld [vmem:[%s227] sm:$0xff]
        %v266 = vld [vmem:[%s227 + $0x8] sm:$0xff]
        %v267 = vld [vmem:[%s227 + $0x10] sm:$0xff]
        %v268 = vld [vmem:[%s227 + $0x18] sm:$0xff]
        %v269 = vld [vmem:[%s261] sm:$0x1]
        %v271 = vlaneseq
        %v272 = vshrl.u32 %v271, 7
        %v273 = vsub.s32 0, %v272
        %v274 = vrot.slane %v269, %v273
        %vm276 = vcmask 261120
        %v278 = vsel %vm276, %v263, 0
        %v281 = vsel %vm276, %v264, 0
        %v284 = vsel %vm276, %v265, 0
        %v287 = vsel %vm276, %v266, 0
        %v290 = vsel %vm276, %v267, 0
        %v293 = vsel %vm276, %v268, 0
        %295 = vmatprep.subr.mxu0 0.0
        %296 = vmatpush1.xpose.msra.mxu0 %v284
        %297 = vmatprep.subr.mxu0 0.0
        %298 = vmatpush1.xpose.msra.mxu0 %v287
        %299 = vmatprep.subr.mxu0 0.0
        %300 = vmatpush1.xpose.msra.mxu0 %v290
        %301 = vmatprep.subr.mxu0 0.0
        %302 = vmatpush1.xpose.msra.mxu0 %v293
        %303 = vmatprep.subr.mxu0 0.0
        %304 = vmatpush1.xpose.msra.mxu0 0.0
        %305 = vmatprep.subr.mxu0 0.0
        %306 = vmatpush1.xpose.msra.mxu0 0.0
        %307 = vmatprep.subr.mxu0 0.0
        %308 = vmatpush1.xpose.msra.mxu0 0.0
        %309 = vmatprep.subr.mxu0 0.0
        %310 = vmatpush1.xpose.msra.mxu0 0.0
        %311 = vmatprep.subr.mxu0 0.0
        %312 = vmatpush1.xpose.msra.mxu0 0.0
        %313 = vmatprep.subr.mxu0 0.0
        %314 = vmatpush1.xpose.msra.mxu0 0.0
        %315 = vmatprep.subr.mxu0 0.0
        %316 = vmatpush1.xpose.msra.mxu0 0.0
        %317 = vmatprep.subr.mxu0 0.0
        %318 = vmatpush1.xpose.msra.mxu0 0.0
        %319 = vmatprep.subr.mxu0 0.0
        %320 = vmatpush1.xpose.msra.mxu0 0.0
        %321 = vmatprep.subr.mxu0 0.0
        %322 = vmatpush1.xpose.msra.mxu0 0.0
        %323 = vmatprep.subr.mxu0 0.0
        %324 = vmatpush1.xpose.msra.mxu0 0.0
        %325 = vmatprep.subr.mxu0 0.0
        %326 = vmatpush1.xpose.msra.mxu0 0.0
        %327 = vmatprep.subr.mxu0 0.0
        %328 = vmatpush1.xpose.msra.mxu0 0.0
        %329 = vmatprep.subr.mxu0 0.0
        %330 = vmatpush1.xpose.msra.mxu0 0.0
        %331 = vmatprep.subr.mxu0 0.0
        %332 = vmatpush1.xpose.msra.mxu0 0.0
        %333 = vmatprep.subr.mxu0 0.0
        %334 = vmatpush1.xpose.msra.mxu0 0.0
        %335 = vmatprep.subr.mxu0 0.0
        %336 = vmatpush1.xpose.msra.mxu0 0.0
        %337 = vmatprep.subr.mxu0 0.0
        %338 = vmatpush1.xpose.msra.mxu0 0.0
        %339 = vmatprep.subr.mxu0 0.0
        %340 = vmatpush1.xpose.msra.mxu0 0.0
        %341 = vmatprep.subr.mxu0 0.0
        %342 = vmatpush1.xpose.msra.mxu0 0.0
        %343 = vmatprep.subr.mxu0 0.0
        %344 = vmatpush1.xpose.msra.mxu0 0.0
        %345 = vmatprep.subr.mxu0 0.0
        %346 = vmatpush1.xpose.msra.mxu0 0.0
        %347 = vmatprep.subr.mxu0 0.0
        %348 = vmatpush1.xpose.msra.mxu0 0.0
        %349 = vmatprep.subr.mxu0 0.0
        %350 = vmatpush1.xpose.msra.mxu0 0.0
        %351 = vmatprep.subr.mxu0 0.0
        %352 = vmatpush1.xpose.msra.mxu0 0.0
        %353 = vmatprep.subr.mxu0 0.0
        %354 = vmatpush1.xpose.msra.mxu0 0.0
        %355 = vmatprep.subr.mxu0 0.0
        %356 = vmatpush1.xpose.msra.mxu0 0.0
        %357 = vmatprep.subr.mxu0 0.0
        %358 = vmatpush1.xpose.msra.mxu0 0.0
        %359 = vmatprep.mubr.f32.mxu0 0.0
        %360 = vmatmul.mubr.f32.gmra.mrb[0].mxu0 %v278
        %v361 = vpop.f32.mrb[0].mxu0
        %v362 = vadd.f32 %v274, %v361
        %v363 = vpop.f32.mrb[0].mxu0
        %364 = vmatprep.mubr.f32.mxu0 0.0
        %365 = vmatmul.mubr.f32.gmra.mrb[0].mxu0 %v281
        %v366 = vpop.f32.mrb[0].mxu0
        %v367 = vadd.f32 %v274, %v366
        %v368 = vpop.f32.mrb[0].mxu0
        %369 = vdwg.mxu0
        %370 = vst.msk [vmem:[%s257] sm:$0xff] %vm276, %v362
        %371 = vst.msk [vmem:[%s257 + $0x8] sm:$0xff] %vm276, %v367
        %s372 = sand.u32 %s125, 1
        %s373 = scalar_lea.sflag [#allocation4], %s372
        %s374 = sand.u32 %s125, 1
        %s375 = smul.addr %s374, 16
        %s376 = scalar_lea.vmem [#allocation7], %s375
        // Predicated region
        $region41: #{tpu_custom_call.1} parent=31 // pred_check
          %p377 = pneg %p135
        $region42: #{tpu_custom_call.1} parent=31 // pred_check_branch
          %379 = sbr.rel (%p377) target = $region44
        $region43: #{tpu_custom_call.1} parent=31 // pred_region
          %s380 = smul.u32 2, %s28
          %s382 = ssub.s32 256, 256
          %383 = vsyncadd %s373, %s382
          %s384 = smul.addr %s27, 2
          %s385 = sadd.s32 %s380, %s384
          %s386 = smul.addr %s385, 128
          %s387 = scalar_lea.hbm %s3, %s386
          %s388 = sshll.u32 %s376, 4
          %s389 = int_to_ptr.vmem [resolvable:$true] %s388
          %394 = dma.vmem_to_hbm [thread:$0]  %s389, 256, %s387, %s373, 128, 128, 8
        $region44: #{tpu_custom_call.1} parent=31 // pred_fallthru
          _
      $region32: #{tpu_custom_call.1} parent=5 // pred_fallthru
        _
      %p395 = scmp.le.s32.totalorder 2, %s18
      // Predicated region
      $region45: #{tpu_custom_call.1} parent=5 // pred_check
        %p396 = pneg %p395
      $region46: #{tpu_custom_call.1} parent=5 // pred_check_branch
        %398 = sbr.rel (%p396) target = $region48
      $region47: #{tpu_custom_call.1} parent=5 // pred_region
        %s399 = ssub.s32 %s18, 2
        // Predicated region
        $region49: #{tpu_custom_call.1} parent=47 // pred_check
          %p400 = pneg %p141
        $region50: #{tpu_custom_call.1} parent=47 // pred_check_branch
          %402 = sbr.rel (%p400) target = $region52
        $region51: #{tpu_custom_call.1} parent=47 // pred_region
          %s403 = sand.u32 %s126, 1
          %s404 = scalar_lea.sflag [#allocation4], %s403
          %s405 = sand.u32 %s126, 1
          %s406 = smul.addr %s405, 16
          %s407 = scalar_lea.vmem [#allocation7], %s406
          %408 = dma.done %s404, 256
        $region52: #{tpu_custom_call.1} parent=47 // pred_fallthru
          _
      $region48: #{tpu_custom_call.1} parent=5 // pred_fallthru
        _
    $region6: #{tpu_custom_call.1} parent=1 // loop_footer
      %s22 = sadd.s32 1, %s18
    $region7: #{tpu_custom_call.1} parent=1 // loop_footer_branch
      %17 = sbr.rel target = $region3
    $region8: #{tpu_custom_call.1} parent=1 // loop_exit
      _
    %409 = vsyncpa [#allocation3], 1
    %s410 = scalar_lea.sflag [#allocation3], 1
    %411 = vsyncpa %s410, 1
    %412 = vsyncpa [#allocation6], 1
    %s413 = scalar_lea.sflag [#allocation6], 1
    %414 = vsyncpa %s413, 1
    %415 = vsyncpa [#allocation4], 1
    %s416 = scalar_lea.sflag [#allocation4], 1
    %417 = vsyncpa %s416, 1

</llo_original>
